<compile_context>
chip_gen: v7x
topology: tpu7x:2x2x1
jax: 0.10.0
libtpu: 0.0.40
codegen_flags: <defaults>
</compile_context>

<pallas_src>
import jax
import jax.numpy as jnp
from jax.experimental import pallas as pl
from jax.experimental.pallas import tpu as pltpu


def _fused_kernel(wb_ref, x_ref, o_ref):
    # wb_ref : (2,) f32 in SMEM          -> [conv_weight, conv_bias]
    # x_ref  : (2, 32, 128) f32 in VMEM, finfo.min padded
    #          plane 0, rows 0..26, lanes 0..4 : channels 0,2,4,6,8 (pair member 0)
    #          plane 1, rows 0..26, lanes 0..4 : channels 1,3,5,7,9 (pair member 1)
    # o_ref  : (1, 128) f32 in VMEM; lanes 0..4 hold the model output.
    w = wb_ref[0]
    b = wb_ref[1]

    # MaxPool3d(kernel=3) over a 3x3x3 volume == global max per channel.
    # Sublane reduction -> lane-dense row of per-channel maxes per pair member.
    m0 = jnp.max(x_ref[0], axis=0, keepdims=True)      # (1, 128) even channels
    m1 = jnp.max(x_ref[1], axis=0, keepdims=True)      # (1, 128) odd channels

    # Conv2d(1,1,k=1) on a 1x1 spatial map == affine w*m + b; then tanh (EUP).
    t0 = jnp.tanh(w * m0 + b)
    t1 = jnp.tanh(w * m1 + b)

    # Pairwise mean of reshape(1,5,2): same lane of the two planes -> no lane
    # movement needed; one unmasked lane-dense store.
    o_ref[...] = (t0 + t1) * 0.5


@jax.jit
def model_forward(x1, conv_w, conv_b):
    """x1: (10, 3, 3, 3) f32, conv_w: (1,1,1,1), conv_b: (1,). Returns (1, 5) f32."""
    C, D, H, W = x1.shape
    assert (C, D, H, W) == (10, 3, 3, 3), "forward is only shape-valid for (10,3,3,3)"

    x_flat = x1.reshape(C, D * H * W).astype(jnp.float32)       # (10, 27)
    even = x_flat[0::2].T                                        # (27, 5): ch 0,2,4,6,8
    odd = x_flat[1::2].T                                         # (27, 5): ch 1,3,5,7,9

    # One lane-dense, vreg-aligned slab; finfo.min fill is neutral for the max
    # and never generates NaN downstream (unlike -inf when w == 0).
    pad_val = jnp.finfo(jnp.float32).min
    x_pad = jnp.full((2, 32, 128), pad_val, dtype=jnp.float32)
    x_pad = x_pad.at[0, :27, 0:5].set(even)
    x_pad = x_pad.at[1, :27, 0:5].set(odd)

    wb = jnp.concatenate(
        [conv_w.reshape(1), conv_b.reshape(1)]).astype(jnp.float32)  # (2,)

    out_row = pl.pallas_call(
        _fused_kernel,
        out_shape=jax.ShapeDtypeStruct((1, 128), jnp.float32),
        in_specs=[
            pl.BlockSpec(memory_space=pltpu.MemorySpace.SMEM),   # [w, b] scalars
            pl.BlockSpec(memory_space=pltpu.MemorySpace.VMEM),   # padded x slab
        ],
        out_specs=pl.BlockSpec(memory_space=pltpu.MemorySpace.VMEM),
        cost_estimate=pl.CostEstimate(
            flops=2 * 32 * 128 * 2 + 4 * 128,          # max-reduce + affine + mean
            transcendentals=2 * 128,                   # tanh lanes
            bytes_accessed=2 * 32 * 128 * 4 + 128 * 4 + 8,
        ),
    )(wb, x_pad)

    return out_row[:, :5]                                        # (1, 5)


def _reference(x1, conv_w, conv_b):
    # Pure-JAX reference of the PyTorch forward (for validation only).
    C = x1.shape[0]
    m = jnp.max(x1.reshape(C, -1), axis=-1)                 # MaxPool3d over 3x3x3
    v3 = conv_w.reshape(()) * m + conv_b.reshape(())        # 1x1 conv (in=out=1)
    v4 = v3.reshape(1, 5, 2)
    return jnp.mean(jnp.tanh(v4), axis=-1)                  # (1, 5)


if __name__ == "__main__":
    key = jax.random.PRNGKey(0)
    kx, kw, kb = jax.random.split(key, 3)

    x1 = jax.random.normal(kx, (10, 3, 3, 3), dtype=jnp.float32)
    # Conv2d(1, 1, kernel_size=(1, 1)) parameters, deterministic in-script init
    # (PyTorch default: U(-1/sqrt(fan_in), 1/sqrt(fan_in)) with fan_in = 1).
    conv_w = jax.random.uniform(kw, (1, 1, 1, 1), jnp.float32, -1.0, 1.0)
    conv_b = jax.random.uniform(kb, (1,), jnp.float32, -1.0, 1.0)

    out = jax.block_until_ready(model_forward(x1, conv_w, conv_b))

    ref = _reference(x1, conv_w, conv_b)
    assert out.shape == (1, 5)
    assert jnp.allclose(out, ref, atol=1e-5, rtol=1e-5)
    print("KERNEL_OK")
</pallas_src>

<mosaic_0001>
module attributes {stable_mosaic.version = 11 : i64} {
  func.func @_fused_kernel(%arg0: memref<2xf32, #tpu.memory_space<smem>>, %arg1: memref<2x32x128xf32, #tpu.memory_space<vmem>>, %arg2: memref<1x128xf32, #tpu.memory_space<vmem>>) attributes {dimension_semantics = [], scalar_prefetch = 0 : i64, scratch_operands = 0 : i64, tpu.core_type = #tpu.core_type<tc>} {
    %c0 = arith.constant 0 : index
    %0 = memref.load %arg0[%c0] : memref<2xf32, #tpu.memory_space<smem>>
    %c1 = arith.constant 1 : index
    %1 = memref.load %arg0[%c1] : memref<2xf32, #tpu.memory_space<smem>>
    %c0_0 = arith.constant 0 : index
    %c0_1 = arith.constant 0 : index
    %c0_2 = arith.constant 0 : index
    %2 = vector.load %arg1[%c0_0, %c0_1, %c0_2] : memref<2x32x128xf32, #tpu.memory_space<vmem>>, vector<1x32x128xf32>
    %3 = vector.shape_cast %2 : vector<1x32x128xf32> to vector<32x128xf32>
    %cst = arith.constant dense<0xFF800000> : vector<128xf32>
    %4 = vector.multi_reduction <maximumf>, %3, %cst [0] : vector<32x128xf32> to vector<128xf32>
    %5 = vector.shape_cast %4 : vector<128xf32> to vector<1x128xf32>
    %c1_3 = arith.constant 1 : index
    %c0_4 = arith.constant 0 : index
    %c0_5 = arith.constant 0 : index
    %6 = vector.load %arg1[%c1_3, %c0_4, %c0_5] : memref<2x32x128xf32, #tpu.memory_space<vmem>>, vector<1x32x128xf32>
    %7 = vector.shape_cast %6 : vector<1x32x128xf32> to vector<32x128xf32>
    %cst_6 = arith.constant dense<0xFF800000> : vector<128xf32>
    %8 = vector.multi_reduction <maximumf>, %7, %cst_6 [0] : vector<32x128xf32> to vector<128xf32>
    %9 = vector.shape_cast %8 : vector<128xf32> to vector<1x128xf32>
    %10 = vector.broadcast %0 : f32 to vector<1x128xf32>
    %11 = arith.mulf %10, %5 : vector<1x128xf32>
    %12 = vector.broadcast %1 : f32 to vector<1x128xf32>
    %13 = arith.addf %11, %12 : vector<1x128xf32>
    %14 = math.tanh %13 : vector<1x128xf32>
    %15 = vector.broadcast %0 : f32 to vector<1x128xf32>
    %16 = arith.mulf %15, %9 : vector<1x128xf32>
    %17 = vector.broadcast %1 : f32 to vector<1x128xf32>
    %18 = arith.addf %16, %17 : vector<1x128xf32>
    %19 = math.tanh %18 : vector<1x128xf32>
    %20 = arith.addf %14, %19 : vector<1x128xf32>
    %cst_7 = arith.constant 5.000000e-01 : f32
    %21 = vector.broadcast %cst_7 : f32 to vector<1x128xf32>
    %22 = arith.mulf %20, %21 : vector<1x128xf32>
    %c0_8 = arith.constant 0 : index
    %c0_9 = arith.constant 0 : index
    %23 = vector.load %arg2[%c0_8, %c0_9] : memref<1x128xf32, #tpu.memory_space<vmem>>, vector<1x128xf32>
    tpu.vector_store %arg2[%c0_8, %c0_9], %22 {strides = array<i32>} : memref<1x128xf32, #tpu.memory_space<vmem>>, vector<1x128xf32>,
    return
  }
}

</mosaic_0001>

<llo_original>
// kernel: model_forward.1
$region0: #{model_forward.1}
  #allocation0 [shape = 'u32[]', space=smem, size = 0x4, offset = 0x4, fixed_abs, tag = 'smem constant byte address 0x4 - core index']
  #allocation1 [shape = 'u32[144,128]{1,0:T(1,128)}', space=vmem, size = 0x12000, scoped, tag = 'internal scratch']
  %s0 = inlined_call_operand.vmem [shape: f32[2], index: 0, kind: input, shape index: {}]
  %s1 = inlined_call_operand.vmem [shape: f32[2,32,128], index: 1, kind: input, shape index: {}]
  %s2 = inlined_call_operand.hbm [shape: f32[1,128], index: 2, kind: output, shape index: {}]
  %s3 = sld [smem:[#allocation0]]
  $region22: #{model_forward.1} parent=0
    _
  %s5 = ssub.s32 1, %s3
  %s6 = scalar_select 0, %s5, %s3
  $region1: #{model_forward.1} parent=0
    #allocation2 [shape = 'u8[512]{0}', space=smem, size = 0x200, scoped, tag = 'input window, operand 0, single buffered']
    #allocation3 [shape = 's32[1]{0}', space=sflag, size = 0x4, scoped, tag = 'scoped memory for model_forward.1']
    #allocation4 [shape = 's32[1]{0}', space=sflag, size = 0x4, scoped, tag = 'scoped memory for model_forward.1']
    #allocation5 [shape = 'u8[512]{0}', space=vmem, size = 0x400, scoped, tag = 'output window, operand 0, single buffered']
    %7 = vsyncpa [#allocation4], 0
    %8 = vsyncpa [#allocation3], 0
    // Predicated region
    $region2: #{model_forward.1} parent=1 // pred_check
      _
    $region3: #{model_forward.1} parent=1 // pred_check_branch
      %10 = sbr.rel (0) target = $region5
    $region4: #{model_forward.1} parent=1 // pred_region
      %s12 = ssub.s32 16, 16
      %13 = vsyncadd [#allocation4], %s12
      %s15 = sshll.u32 %s0, 4
      %s16 = int_to_ptr.vmem [resolvable:$true] %s15
      %18 = dma.vmem_to_smem %s16, 16, [#allocation2], [#allocation4]
    $region5: #{model_forward.1} parent=1 // pred_fallthru
      _
    // Predicated region
    $region6: #{model_forward.1} parent=1 // pred_check
      _
    $region7: #{model_forward.1} parent=1 // pred_check_branch
      %20 = sbr.rel (0) target = $region9
    $region8: #{model_forward.1} parent=1 // pred_region
      _
    $region9: #{model_forward.1} parent=1 // pred_fallthru
      _
    // Predicated region
    $region10: #{model_forward.1} parent=1 // pred_check
      _
    $region11: #{model_forward.1} parent=1 // pred_check_branch
      %22 = sbr.rel (0) target = $region13
    $region12: #{model_forward.1} parent=1 // pred_region
      %23 = dma.done [#allocation4], 16
    $region13: #{model_forward.1} parent=1 // pred_fallthru
      _
    %24 = sfence
    %s25 = sld [smem:[#allocation2]]
    %s26 = sld [smem:[#allocation2 + $0x1]]
    %v27 = vld [vmem:[%s1] sm:$0xff]
    %v28 = vld [vmem:[%s1 + $0x8] sm:$0xff]
    %v29 = vld [vmem:[%s1 + $0x10] sm:$0xff]
    %v30 = vld [vmem:[%s1 + $0x18] sm:$0xff]
    %v31 = vmax.f32 %v27, %v28
    %v32 = vmax.f32 %v29, %v30
    %v33 = vmax.f32 %v31, %v32
    %v34 = vrot.slane %v33, 4
    %v35 = vmax.f32 %v33, %v34
    %v36 = vrot.slane %v35, 2
    %v37 = vmax.f32 %v35, %v36
    %v38 = vrot.slane %v37, 1
    %v39 = vmax.f32 %v37, %v38
    %s40 = scalar_lea.vmem %s1, 32
    %v41 = vld [vmem:[%s40] sm:$0xff]
    %v42 = vld [vmem:[%s40 + $0x8] sm:$0xff]
    %v43 = vld [vmem:[%s40 + $0x10] sm:$0xff]
    %v44 = vld [vmem:[%s40 + $0x18] sm:$0xff]
    %v45 = vmax.f32 %v41, %v42
    %v46 = vmax.f32 %v43, %v44
    %v47 = vmax.f32 %v45, %v46
    %v48 = vrot.slane %v47, 4
    %v49 = vmax.f32 %v47, %v48
    %v50 = vrot.slane %v49, 2
    %v51 = vmax.f32 %v49, %v50
    %v52 = vrot.slane %v51, 1
    %v53 = vmax.f32 %v51, %v52
    %v54 = vstv %s25
    %v55 = vmul.f32 %v54, %v39
    %v56 = vstv %s26
    %v57 = vadd.f32 %v55, %v56
    %v58 = vtanh.pop %v57
    %v59 = vmul.f32 %v54, %v53
    %v60 = vadd.f32 %v59, %v56
    %v61 = vtanh.pop %v60
    %v62 = vadd.f32 %v58, %v61
    %v63 = vmul.f32 %v62, 0.5
    %64 = vst [vmem:[#allocation5] sm:$0x1] %v63
    // Predicated region
    $region14: #{model_forward.1} parent=1 // pred_check
      _
    $region15: #{model_forward.1} parent=1 // pred_check_branch
      %66 = sbr.rel (0) target = $region17
    $region16: #{model_forward.1} parent=1 // pred_region
      %s68 = ssub.s32 16, 16
      %69 = vsyncadd [#allocation3], %s68
      %s71 = sshll.u32 [#allocation5], 4
      %s72 = int_to_ptr.vmem [resolvable:$true] %s71
      %74 = dma.vmem_to_hbm [thread:$0]  %s72, 16, %s2, [#allocation3]
    $region17: #{model_forward.1} parent=1 // pred_fallthru
      _
    // Predicated region
    $region18: #{model_forward.1} parent=1 // pred_check
      _
    $region19: #{model_forward.1} parent=1 // pred_check_branch
      %76 = sbr.rel (0) target = $region21
    $region20: #{model_forward.1} parent=1 // pred_region
      %77 = dma.done [#allocation3], 16
    $region21: #{model_forward.1} parent=1 // pred_fallthru
      _
    %78 = vsyncpa [#allocation3], 1
    %79 = vsyncpa [#allocation4], 1

</llo_original>
